<compile_context>
chip_gen: v6e
topology: v6e:2x2x1
jax: 0.10.0
libtpu: 0.0.40
codegen_flags: <defaults>
</compile_context>

<pallas_src>
import jax
import jax.numpy as jnp
from jax.experimental import pallas as pl
from jax.experimental.pallas import tpu as pltpu


_BLOCK_BYTES = 2 * 1024 * 1024   # ~2 MiB per block, independent of dtype
_MIN_GRID_STEPS = 4              # keep the pipeline >= 4 deep on mid-size arrays
_LANE_CANDIDATES = (1024, 512, 256, 128)  # lane-dense last dims (multiples of 128)


def _round_up(a: int, b: int) -> int:
    return ((a + b - 1) // b) * b


def _scale_kernel(scale_ref, x_ref, o_ref):
    # scale_ref: (1,1) f32 in SMEM (runtime scalar, no recompile per value).
    # Multiply in f32 and cast back (more accurate than rounding the scale to a
    # low-precision dtype first); VALU/EUP are idle in this mem-bound kernel.
    s = scale_ref[0, 0]
    o_ref[...] = (x_ref[...].astype(jnp.float32) * s).astype(o_ref.dtype)


def _elementwise_scale(x: jax.Array, scale) -> jax.Array:
    """Computes `x * scale` (scale broadcast scalar), preserving shape/dtype.

    Uses the tiled Pallas kernel whenever the flat size tiles into a lane-dense
    (M, lane) slab with lane a multiple of 128; otherwise falls back to a single
    fused XLA multiply (cheaper than pad + kernel + slice for ragged shapes).
    """
    n = x.size
    if n == 0:
        return x

    lane = 0
    for cand in _LANE_CANDIDATES:
        if n % cand == 0:
            lane = cand
            break
    if lane == 0:
        # Sub-128 ragged tail: one fused XLA op, no extra HBM round trips.
        return (x.astype(jnp.float32) * scale).astype(x.dtype)

    m = n // lane
    x2d = x.reshape(m, lane)
    itemsize = jnp.dtype(x.dtype).itemsize

    # Bytes-based block sizing (~2 MiB regardless of dtype), clamped so that
    # mid-size arrays still get >= _MIN_GRID_STEPS pipelined grid steps.
    cap_rows = max(8, _BLOCK_BYTES // (lane * itemsize))
    if m <= 8:
        block_m = m                       # full extent (legal even if not %8)
    else:
        block_m = min(cap_rows, max(8, _round_up(pl.cdiv(m, _MIN_GRID_STEPS), 8)))
        block_m = min(block_m, _round_up(m, 8))
    grid = (pl.cdiv(m, block_m),)         # partial edge block is masked by Pallas

    scale_arr = jnp.asarray(scale, jnp.float32).reshape(1, 1)

    out2d = pl.pallas_call(
        _scale_kernel,
        out_shape=jax.ShapeDtypeStruct(x2d.shape, x2d.dtype),
        grid=grid,
        in_specs=[
            pl.BlockSpec(memory_space=pltpu.MemorySpace.SMEM),   # runtime coeff
            pl.BlockSpec((block_m, lane), lambda i: (i, 0)),     # gradient tile
        ],
        out_specs=pl.BlockSpec((block_m, lane), lambda i: (i, 0)),
        # Alias the gradient slab to the output: no second full-size HBM alloc
        # when the cotangent buffer is dead after this op.
        input_output_aliases={1: 0},
        compiler_params=pltpu.CompilerParams(
            dimension_semantics=("parallel",),
        ),
    )(scale_arr, x2d)

    return out2d.reshape(x.shape)


@jax.custom_vjp
def _grl(x: jax.Array, coeff: jax.Array) -> jax.Array:
    # Forward: output = input * 1.0  -> exact identity, zero cost.
    return x


def _grl_fwd(x, coeff):
    return x, coeff            # only the (traced) coeff is needed for backward


def _grl_bwd(coeff, g):
    # Backward hot path: grad_input = -coeff * grad_output via the Pallas kernel.
    # coeff is a traced scalar -> no retrace/recompile when the ramp schedule
    # changes its value step to step.
    return _elementwise_scale(g, -coeff), jnp.zeros_like(coeff)


_grl.defvjp(_grl_fwd, _grl_bwd)


def gradient_reverse_layer(x: jax.Array, coeff=1.0) -> jax.Array:
    """GradientReverseLayer: identity forward, -coeff-scaled gradient backward."""
    return _grl(x, jnp.asarray(coeff, jnp.float32))


if __name__ == "__main__":
    key = jax.random.PRNGKey(0)
    x = jax.random.normal(key, (2, 4, 16, 16), dtype=jnp.float32)  # NCHW

    # Forward pass: must be an exact identity.
    coeff = 1.5
    y = jax.block_until_ready(gradient_reverse_layer(x, coeff))
    assert y.shape == x.shape and y.dtype == x.dtype
    assert bool(jnp.allclose(y, x)), "forward must be identity"

    # Backward pass (runs the Pallas kernel): grad = -coeff * upstream grad.
    loss_fn = lambda inp, c: jnp.sum(gradient_reverse_layer(inp, c) * 2.0)
    grad = jax.block_until_ready(jax.grad(loss_fn)(x, coeff))
    assert grad.shape == x.shape and grad.dtype == x.dtype
    assert bool(jnp.allclose(grad, -coeff * 2.0 * jnp.ones_like(x))), "bwd mismatch"

    # Same compiled kernel, different coeff (runtime scalar -> no recompile).
    grad2 = jax.block_until_ready(jax.grad(loss_fn)(x, 0.25))
    assert bool(jnp.allclose(grad2, -0.25 * 2.0 * jnp.ones_like(x))), "bwd coeff mismatch"

    # bf16 gradients exercise the bytes-based block sizing.
    xb = jax.random.normal(key, (2, 8, 128), dtype=jnp.bfloat16)
    gb = jax.block_until_ready(
        jax.grad(lambda inp: jnp.sum(gradient_reverse_layer(inp, 0.5).astype(jnp.float32)))(xb)
    )
    assert gb.shape == xb.shape and gb.dtype == xb.dtype
    assert bool(jnp.allclose(gb.astype(jnp.float32), -0.5 * jnp.ones(xb.shape, jnp.float32))), \
        "bf16 bwd mismatch"

    # Ragged (sub-128) size goes through the fused XLA fallback (no pad/slice).
    x_ragged = jax.random.normal(key, (3, 5, 7), dtype=jnp.float32)
    g_ragged = jax.block_until_ready(
        jax.grad(lambda inp: jnp.sum(gradient_reverse_layer(inp, coeff)))(x_ragged)
    )
    assert bool(jnp.allclose(g_ragged, -coeff * jnp.ones_like(x_ragged))), "ragged bwd mismatch"

    print("KERNEL_OK")
</pallas_src>

<mosaic_0001>
module attributes {stable_mosaic.version = 11 : i64} {
  func.func @_scale_kernel(%arg0: i32, %arg1: memref<1x1xf32, #tpu.memory_space<smem>>, %arg2: memref<2x1024xf32, #tpu.memory_space<vmem>>, %arg3: memref<2x1024xf32, #tpu.memory_space<vmem>>) attributes {dimension_semantics = [#tpu.dimension_semantics<parallel>], iteration_bounds = array<i64: 1>, scalar_prefetch = 0 : i64, scratch_operands = 0 : i64, tpu.core_type = #tpu.core_type<tc>, window_params = [{transform_indices = @transform_0, window_bounds = array<i64: 1, 1>}, {transform_indices = @transform_1, window_bounds = array<i64: 2, 1024>}, {transform_indices = @transform_2, window_bounds = array<i64: 2, 1024>}]} {
    %c0 = arith.constant 0 : index
    %c0_0 = arith.constant 0 : index
    %0 = memref.load %arg1[%c0, %c0_0] : memref<1x1xf32, #tpu.memory_space<smem>>
    %c0_1 = arith.constant 0 : index
    %c0_2 = arith.constant 0 : index
    %1 = vector.load %arg2[%c0_1, %c0_2] : memref<2x1024xf32, #tpu.memory_space<vmem>>, vector<2x1024xf32>
    %2 = vector.broadcast %0 : f32 to vector<2x1024xf32>
    %3 = arith.mulf %1, %2 : vector<2x1024xf32>
    %c0_3 = arith.constant 0 : index
    %c0_4 = arith.constant 0 : index
    %4 = vector.load %arg3[%c0_3, %c0_4] : memref<2x1024xf32, #tpu.memory_space<vmem>>, vector<2x1024xf32>
    tpu.vector_store %arg3[%c0_3, %c0_4], %3 {strides = array<i32>} : memref<2x1024xf32, #tpu.memory_space<vmem>>, vector<2x1024xf32>,
    return
  }
  func.func @transform_0(%arg0: i32) -> (i32, i32) {
    %c0_i32 = arith.constant 0 : i32
    %c0_i32_0 = arith.constant 0 : i32
    %c0_i32_1 = arith.constant 0 : i32
    return %c0_i32, %c0_i32_0 : i32, i32
  }
  func.func @transform_1(%arg0: i32) -> (i32, i32) {
    %c0_i32 = arith.constant 0 : i32
    %c0_i32_0 = arith.constant 0 : i32
    return %arg0, %c0_i32 : i32, i32
  }
  func.func @transform_2(%arg0: i32) -> (i32, i32) {
    %c0_i32 = arith.constant 0 : i32
    %c0_i32_0 = arith.constant 0 : i32
    return %arg0, %c0_i32 : i32, i32
  }
}

</mosaic_0001>

<llo_original>
// kernel: tpu_custom_call.1
$region0: #{tpu_custom_call.1}
  #allocation0 [shape = 'u32[]', space=smem, size = 0x4, offset = 0x4, fixed_abs, tag = 'smem constant byte address 0x4 - core index']
  #allocation1 [shape = 'u32[144,128]{1,0:T(1,128)}', space=vmem, size = 0x12000, scoped, tag = 'internal scratch']
  #allocation2 [shape = 'f32[1,1]{1,0:T(1,128)S(6)}', space=smem, size = 0x200, scoped, tag = 'scoped memory for tpu_custom_call.1']
  %s0 = inlined_call_operand.<no memory space> [shape: f32[1,1], index: 0, kind: input, shape index: {}]
  %s1 = inlined_call_operand.hbm [shape: f32[2,1024], index: 1, kind: input, shape index: {}, may-alias: {1,2}]
  %s2 = inlined_call_operand.hbm [shape: f32[2,1024], index: 2, kind: output, shape index: {}, may-alias: {1,2}]
  %s3 = sld [smem:[#allocation0]]
  $region22: #{tpu_custom_call.1} parent=0
    _
  %s5 = ssub.s32 1, %s3
  %s6 = scalar_select 0, %s5, %s3
  %7 = sst [smem:[#allocation2]] %s0
  $region1: #{tpu_custom_call.1} parent=0
    #allocation3 [shape = 'u8[8192]{0}', space=vmem, size = 0x2000, scoped, tag = 'input window, operand 1, single buffered']
    #allocation4 [shape = 's32[1]{0}', space=sflag, size = 0x4, scoped, tag = 'scoped memory for tpu_custom_call.1']
    #allocation5 [shape = 's32[1]{0}', space=sflag, size = 0x4, scoped, tag = 'scoped memory for tpu_custom_call.1']
    #allocation6 [shape = 'u8[8192]{0}', space=vmem, size = 0x2000, scoped, tag = 'output window, operand 0, single buffered']
    %8 = vsyncpa [#allocation4], 0
    %9 = vsyncpa [#allocation5], 0
    // Predicated region
    $region2: #{tpu_custom_call.1} parent=1 // pred_check
      _
    $region3: #{tpu_custom_call.1} parent=1 // pred_check_branch
      %11 = sbr.rel (0) target = $region5
    $region4: #{tpu_custom_call.1} parent=1 // pred_region
      _
    $region5: #{tpu_custom_call.1} parent=1 // pred_fallthru
      _
    // Predicated region
    $region6: #{tpu_custom_call.1} parent=1 // pred_check
      _
    $region7: #{tpu_custom_call.1} parent=1 // pred_check_branch
      %13 = sbr.rel (0) target = $region9
    $region8: #{tpu_custom_call.1} parent=1 // pred_region
      %s15 = ssub.s32 256, 256
      %16 = vsyncadd [#allocation4], %s15
      %s18 = sshll.u32 [#allocation3], 4
      %s19 = int_to_ptr.vmem [resolvable:$true] %s18
      %21 = dma.hbm_to_vmem [thread:$0]  %s1, 256, %s19, [#allocation4]
    $region9: #{tpu_custom_call.1} parent=1 // pred_fallthru
      _
    // Predicated region
    $region10: #{tpu_custom_call.1} parent=1 // pred_check
      _
    $region11: #{tpu_custom_call.1} parent=1 // pred_check_branch
      %23 = sbr.rel (0) target = $region13
    $region12: #{tpu_custom_call.1} parent=1 // pred_region
      %24 = dma.done [#allocation4], 256
    $region13: #{tpu_custom_call.1} parent=1 // pred_fallthru
      _
    %s25 = sld [smem:[#allocation2]]
    %v26 = vld [vmem:[#allocation3] sm:$0xff]
    %v27 = vld [vmem:[#allocation3 + $0x8] sm:$0xff]
    %v28 = vstv %s25
    %v29 = vmul.f32 %v26, %v28
    %v30 = vmul.f32 %v27, %v28
    %31 = vst [vmem:[#allocation6] sm:$0xff] %v29
    %32 = vst [vmem:[#allocation6 + $0x8] sm:$0xff] %v30
    // Predicated region
    $region14: #{tpu_custom_call.1} parent=1 // pred_check
      _
    $region15: #{tpu_custom_call.1} parent=1 // pred_check_branch
      %34 = sbr.rel (0) target = $region17
    $region16: #{tpu_custom_call.1} parent=1 // pred_region
      %s36 = ssub.s32 256, 256
      %37 = vsyncadd [#allocation5], %s36
      %s39 = sshll.u32 [#allocation6], 4
      %s40 = int_to_ptr.vmem [resolvable:$true] %s39
      %42 = dma.vmem_to_hbm [thread:$0]  %s40, 256, %s2, [#allocation5]
    $region17: #{tpu_custom_call.1} parent=1 // pred_fallthru
      _
    // Predicated region
    $region18: #{tpu_custom_call.1} parent=1 // pred_check
      _
    $region19: #{tpu_custom_call.1} parent=1 // pred_check_branch
      %44 = sbr.rel (0) target = $region21
    $region20: #{tpu_custom_call.1} parent=1 // pred_region
      %45 = dma.done [#allocation5], 256
    $region21: #{tpu_custom_call.1} parent=1 // pred_fallthru
      _
    %46 = vsyncpa [#allocation4], 1
    %47 = vsyncpa [#allocation5], 1

</llo_original>
